<compile_context>
chip_gen: v7x
topology: tpu7x:2x2x1
jax: 0.10.0
libtpu: 0.0.40
codegen_flags: <defaults>
</compile_context>

<pallas_src>
import functools

import jax
import jax.numpy as jnp
import numpy as np
from jax.experimental import pallas as pl
from jax.experimental.pallas import tpu as pltpu

N_BINS = 15
_LANES = 128        # accumulator lane width (one vreg row); bins live in lanes 0..N_BINS-1
_MAX_SLICES = 2     # leading "parallel" grid axis (both TCs on v7x; harmless on 1-TC chips)


def _ece_kernel(x_ref, y_ref, out_ref, acc_ref, *,
                n_rows, tile_n, tiles_per_slice, n_bins):
    """Accumulate per-bin sum(confidence) and sum(accuracy) for one (TILE_N, C) tile."""
    c = pl.program_id(0)          # which slice of the rows (parallel axis)
    i = pl.program_id(1)          # tile index within the slice (reduction axis)

    @pl.when(i == 0)
    def _():
        acc_ref[...] = jnp.zeros_like(acc_ref)

    x = x_ref[...].astype(jnp.float32)        # (TILE_N, C) logits
    y = y_ref[...].astype(jnp.float32)        # (TILE_N, C) one-hot / soft labels
    tn, nc = x.shape

    # confidence = max(softmax(x)) = 1 / sum(exp(x - max(x)))   (no full softmax needed)
    row_max = jnp.max(x, axis=1, keepdims=True)                      # (TILE_N, 1)
    denom = jnp.sum(jnp.exp(x - row_max), axis=1, keepdims=True)     # (TILE_N, 1)
    conf = 1.0 / denom                                               # exact divide

    # argmax (first maximal index) for predictions and labels (PyTorch tie-breaking)
    col_ids = jax.lax.broadcasted_iota(jnp.int32, (tn, nc), 1)
    preds = jnp.min(jnp.where(x == row_max, col_ids, nc), axis=1, keepdims=True)
    lab_max = jnp.max(y, axis=1, keepdims=True)
    lab_idx = jnp.min(jnp.where(y == lab_max, col_ids, nc), axis=1, keepdims=True)
    acc_val = (preds == lab_idx).astype(jnp.float32)                 # (TILE_N, 1)

    # mask rows past the true N (ragged last tile / overhang blocks of the slice split)
    row_ids = jax.lax.broadcasted_iota(jnp.int32, (tn, 1), 0)
    base = (c * tiles_per_slice + i) * tile_n
    valid = (base + row_ids) < n_rows
    conf_m = jnp.where(valid, conf, 0.0)
    acc_m = jnp.where(valid, acc_val, 0.0)

    # bin index for (lo, hi] bins: ceil(conf * n_bins) - 1, clipped; one-hot over 128 lanes
    bidx = jnp.clip(jnp.ceil(conf * float(n_bins)).astype(jnp.int32) - 1, 0, n_bins - 1)
    lane_ids = jax.lax.broadcasted_iota(jnp.int32, (tn, _LANES), 1)
    in_bin = lane_ids == bidx                                        # (TILE_N, 128) one-hot

    tile_sums = jnp.concatenate(
        [jnp.sum(jnp.where(in_bin, conf_m, 0.0), axis=0, keepdims=True),  # per-bin sum(conf)
         jnp.sum(jnp.where(in_bin, acc_m, 0.0), axis=0, keepdims=True)],  # per-bin sum(acc)
        axis=0)                                                      # (2, 128)
    acc_ref[...] += tile_sums

    @pl.when(i == tiles_per_slice - 1)
    def _():
        out_ref[0, :, :] = acc_ref[...]


def ece_pallas(logits, labels, n_bins=N_BINS):
    """logits: (N, C), labels: (N, C) one-hot / soft.  Returns (1,) float32 ECE.

    Inputs are streamed at their native dtype (bf16 passes straight through);
    all math happens in f32 inside the kernel.
    """
    N, C = logits.shape
    assert labels.shape == (N, C)

    # Row tile sized against the lane-padded class width so the actual VMEM footprint of
    # a double-buffered pair of input blocks stays well inside the default scoped-VMEM
    # budget on every generation (v5e 16 MiB .. v7x 32 MiB scoped / 64 MiB phys), while
    # being large enough to amortize per-grid-step overhead (~0.35 us/step).
    itemsize = max(jnp.dtype(logits.dtype).itemsize, jnp.dtype(labels.dtype).itemsize)
    c_padded = max(_LANES, ((C + _LANES - 1) // _LANES) * _LANES)    # lane-padded width
    budget_bytes = 2 * 1024 * 1024                                   # per input block
    if N >= 32:
        tile_n = min(4096, max(32, budget_bytes // (c_padded * itemsize)), N)
        tile_n = max(32, (tile_n // 32) * 32)        # sublane-aligned for any input dtype
    else:
        tile_n = N                                   # full-dim block is always legal

    total_tiles = pl.cdiv(N, tile_n)
    # Adaptive parallel split: don't emit redundant clamped/masked tiles for tiny inputs.
    num_slices = min(_MAX_SLICES, total_tiles)
    tiles_per_slice = pl.cdiv(total_tiles, num_slices)

    def in_map(c, i):
        # clamp overhang blocks in-bounds; their rows are masked out inside the kernel
        return (jnp.minimum(c * tiles_per_slice + i, total_tiles - 1), 0)

    kernel = functools.partial(
        _ece_kernel, n_rows=N, tile_n=tile_n,
        tiles_per_slice=tiles_per_slice, n_bins=n_bins)

    partials = pl.pallas_call(
        kernel,
        out_shape=jax.ShapeDtypeStruct((num_slices, 2, _LANES), jnp.float32),
        grid_spec=pltpu.PrefetchScalarGridSpec(
            num_scalar_prefetch=0,
            grid=(num_slices, tiles_per_slice),
            in_specs=[pl.BlockSpec((tile_n, C), in_map),
                      pl.BlockSpec((tile_n, C), in_map)],
            out_specs=pl.BlockSpec((1, 2, _LANES), lambda c, i: (c, 0, 0)),
            scratch_shapes=[pltpu.VMEM((2, _LANES), jnp.float32)]),
        compiler_params=pltpu.CompilerParams(
            dimension_semantics=("parallel", "arbitrary")),
    )(logits, labels)

    # Finalize: combine the slices' per-bin partial sums, abs, sum, divide by true N.
    totals = jnp.sum(partials, axis=0)                   # (2, 128)
    ece = jnp.sum(jnp.abs(totals[0] - totals[1])) / jnp.float32(N)
    return ece.reshape(1)


def ece_reference(logits, labels, n_bins=N_BINS):
    """Plain-JAX reference mirroring the PyTorch loop, for verification."""
    softm = jax.nn.softmax(logits.astype(jnp.float32), axis=1)
    conf = jnp.max(softm, axis=1)
    preds = jnp.argmax(logits, axis=1)
    lab = jnp.argmax(labels, axis=1)
    acc = (preds == lab).astype(jnp.float32)
    boundaries = np.linspace(0, 1, n_bins + 1)
    ece = jnp.zeros((1,), jnp.float32)
    for lo, hi in zip(boundaries[:-1], boundaries[1:]):
        in_bin = jnp.logical_and(conf > lo, conf <= hi).astype(jnp.float32)
        prop = jnp.mean(in_bin)
        cnt = jnp.sum(in_bin)
        acc_in = jnp.where(cnt > 0, jnp.sum(acc * in_bin) / jnp.maximum(cnt, 1.0), 0.0)
        conf_in = jnp.where(cnt > 0, jnp.sum(conf * in_bin) / jnp.maximum(cnt, 1.0), 0.0)
        ece = ece + jnp.where(cnt > 0, jnp.abs(conf_in - acc_in) * prop, 0.0)
    return ece


if __name__ == "__main__":
    key = jax.random.PRNGKey(0)
    k1, k2, k3, k4, k5, k6 = jax.random.split(key, 6)

    # Primary test: (batch, num_classes) as the module expects.
    N, C = 64, 16
    logits = jax.random.normal(k1, (N, C), dtype=jnp.float32) * 2.0
    labels = jax.nn.one_hot(jax.random.randint(k2, (N,), 0, C), C, dtype=jnp.float32)
    ece = ece_pallas(logits, labels)
    jax.block_until_ready(ece)
    np.testing.assert_allclose(np.asarray(ece),
                               np.asarray(ece_reference(logits, labels)),
                               atol=1e-5, rtol=1e-5)

    # Ragged N: exercises the in-kernel row masking and the adaptive slice split.
    N2, C2 = 100, 24
    logits2 = jax.random.normal(k3, (N2, C2), dtype=jnp.float32)
    labels2 = jax.nn.one_hot(jax.random.randint(k4, (N2,), 0, C2), C2, dtype=jnp.float32)
    ece2 = ece_pallas(logits2, labels2)
    jax.block_until_ready(ece2)
    np.testing.assert_allclose(np.asarray(ece2),
                               np.asarray(ece_reference(logits2, labels2)),
                               atol=1e-5, rtol=1e-5)

    # Multi-tile N: exercises the streaming accumulator across several grid steps.
    N3, C3 = 4096 + 40, 32
    logits3 = jax.random.normal(k5, (N3, C3), dtype=jnp.float32)
    labels3 = jax.nn.one_hot(jax.random.randint(k6, (N3,), 0, C3), C3, dtype=jnp.float32)
    ece3 = ece_pallas(logits3, labels3)
    jax.block_until_ready(ece3)
    np.testing.assert_allclose(np.asarray(ece3),
                               np.asarray(ece_reference(logits3, labels3)),
                               atol=1e-5, rtol=1e-5)

    print("KERNEL_OK")
</pallas_src>

<mosaic_0001>
module attributes {stable_mosaic.version = 11 : i64} {
  func.func @_ece_kernel(%arg0: i32, %arg1: i32, %arg2: memref<64x16xf32, #tpu.memory_space<vmem>>, %arg3: memref<64x16xf32, #tpu.memory_space<vmem>>, %arg4: memref<1x2x128xf32, #tpu.memory_space<vmem>>, %arg5: memref<2x128xf32, #tpu.memory_space<vmem>>) attributes {dimension_semantics = [#tpu.dimension_semantics<parallel>, #tpu.dimension_semantics<arbitrary>], iteration_bounds = array<i64: 1, 1>, scalar_prefetch = 0 : i64, scratch_operands = 1 : i64, tpu.core_type = #tpu.core_type<tc>, window_params = [{transform_indices = @transform_0, window_bounds = array<i64: 64, 16>}, {transform_indices = @transform_1, window_bounds = array<i64: 64, 16>}, {transform_indices = @transform_2, window_bounds = array<i64: 1, 2, 128>}]} {
    %c0_i32 = arith.constant 0 : i32
    %0 = arith.cmpi eq, %arg1, %c0_i32 : i32
    %1 = arith.extui %0 : i1 to i32
    %c0_i32_0 = arith.constant 0 : i32
    %2 = arith.cmpi ne, %1, %c0_i32_0 : i32
    scf.if %2 {
      %cst_26 = arith.constant 0.000000e+00 : f32
      %76 = vector.broadcast %cst_26 : f32 to vector<2x128xf32>
      %c0_27 = arith.constant 0 : index
      %c0_28 = arith.constant 0 : index
      %77 = vector.load %arg5[%c0_27, %c0_28] : memref<2x128xf32, #tpu.memory_space<vmem>>, vector<2x128xf32>
      tpu.vector_store %arg5[%c0_27, %c0_28], %76 {strides = array<i32>} : memref<2x128xf32, #tpu.memory_space<vmem>>, vector<2x128xf32>,
    } else {
    }
    %c0 = arith.constant 0 : index
    %c0_1 = arith.constant 0 : index
    %3 = vector.load %arg2[%c0, %c0_1] : memref<64x16xf32, #tpu.memory_space<vmem>>, vector<64x16xf32>
    %c0_2 = arith.constant 0 : index
    %c0_3 = arith.constant 0 : index
    %4 = vector.load %arg3[%c0_2, %c0_3] : memref<64x16xf32, #tpu.memory_space<vmem>>, vector<64x16xf32>
    %cst = arith.constant dense<0xFF800000> : vector<64xf32>
    %5 = vector.multi_reduction <maximumf>, %3, %cst [1] : vector<64x16xf32> to vector<64xf32>
    %6 = vector.shape_cast %5 : vector<64xf32> to vector<64x1xf32>
    %7 = vector.broadcast %6 : vector<64x1xf32> to vector<64x16xf32>
    %8 = arith.subf %3, %7 : vector<64x16xf32>
    %9 = math.exp %8 : vector<64x16xf32>
    %cst_4 = arith.constant dense<0.000000e+00> : vector<64xf32>
    %10 = vector.multi_reduction <add>, %9, %cst_4 [1] : vector<64x16xf32> to vector<64xf32>
    %11 = vector.shape_cast %10 : vector<64xf32> to vector<64x1xf32>
    %cst_5 = arith.constant 1.000000e+00 : f32
    %12 = vector.broadcast %cst_5 : f32 to vector<64x1xf32>
    %13 = arith.divf %12, %11 : vector<64x1xf32>
    %14 = tpu.iota {dimensions = array<i32: 1>} : vector<64x16xi32>
    %15 = vector.broadcast %6 : vector<64x1xf32> to vector<64x16xf32>
    %16 = arith.cmpf oeq, %3, %15 : vector<64x16xf32>
    %c16_i32 = arith.constant 16 : i32
    %17 = vector.broadcast %c16_i32 : i32 to vector<64x16xi32>
    %18 = arith.select %16, %14, %17 : vector<64x16xi1>, vector<64x16xi32>
    %cst_6 = arith.constant dense<2147483647> : vector<64xi32>
    %19 = vector.multi_reduction <minsi>, %18, %cst_6 [1] : vector<64x16xi32> to vector<64xi32>
    %20 = vector.shape_cast %19 : vector<64xi32> to vector<64x1xi32>
    %cst_7 = arith.constant dense<0xFF800000> : vector<64xf32>
    %21 = vector.multi_reduction <maximumf>, %4, %cst_7 [1] : vector<64x16xf32> to vector<64xf32>
    %22 = vector.shape_cast %21 : vector<64xf32> to vector<64x1xf32>
    %23 = vector.broadcast %22 : vector<64x1xf32> to vector<64x16xf32>
    %24 = arith.cmpf oeq, %4, %23 : vector<64x16xf32>
    %c16_i32_8 = arith.constant 16 : i32
    %25 = vector.broadcast %c16_i32_8 : i32 to vector<64x16xi32>
    %26 = arith.select %24, %14, %25 : vector<64x16xi1>, vector<64x16xi32>
    %cst_9 = arith.constant dense<2147483647> : vector<64xi32>
    %27 = vector.multi_reduction <minsi>, %26, %cst_9 [1] : vector<64x16xi32> to vector<64xi32>
    %28 = vector.shape_cast %27 : vector<64xi32> to vector<64x1xi32>
    %29 = arith.cmpi eq, %20, %28 : vector<64x1xi32>
    %30 = arith.extui %29 : vector<64x1xi1> to vector<64x1xi32>
    %31 = arith.sitofp %30 : vector<64x1xi32> to vector<64x1xf32>
    %32 = tpu.iota {dimensions = array<i32: 0>} : vector<64x1xi32>
    %c1_i32 = arith.constant 1 : i32
    %33 = arith.muli %arg0, %c1_i32 : i32
    %34 = arith.addi %33, %arg1 : i32
    %c64_i32 = arith.constant 64 : i32
    %35 = arith.muli %34, %c64_i32 : i32
    %36 = vector.broadcast %35 : i32 to vector<64x1xi32>
    %37 = arith.addi %36, %32 : vector<64x1xi32>
    %c64_i32_10 = arith.constant 64 : i32
    %38 = vector.broadcast %c64_i32_10 : i32 to vector<64x1xi32>
    %39 = arith.cmpi slt, %37, %38 : vector<64x1xi32>
    %cst_11 = arith.constant 0.000000e+00 : f32
    %40 = vector.broadcast %cst_11 : f32 to vector<64x1xf32>
    %41 = arith.select %39, %13, %40 : vector<64x1xi1>, vector<64x1xf32>
    %cst_12 = arith.constant 0.000000e+00 : f32
    %42 = vector.broadcast %cst_12 : f32 to vector<64x1xf32>
    %43 = arith.select %39, %31, %42 : vector<64x1xi1>, vector<64x1xf32>
    %cst_13 = arith.constant 1.500000e+01 : f32
    %44 = vector.broadcast %cst_13 : f32 to vector<64x1xf32>
    %45 = arith.mulf %13, %44 : vector<64x1xf32>
    %46 = math.ceil %45 : vector<64x1xf32>
    %47 = arith.fptosi %46 : vector<64x1xf32> to vector<64x1xi32>
    %c1_i32_14 = arith.constant 1 : i32
    %48 = vector.broadcast %c1_i32_14 : i32 to vector<64x1xi32>
    %49 = arith.subi %47, %48 : vector<64x1xi32>
    %c0_i32_15 = arith.constant 0 : i32
    %c14_i32 = arith.constant 14 : i32
    %50 = vector.broadcast %c0_i32_15 : i32 to vector<64x1xi32>
    %51 = arith.maxsi %50, %49 : vector<64x1xi32>
    %52 = vector.broadcast %c14_i32 : i32 to vector<64x1xi32>
    %53 = arith.minsi %52, %51 : vector<64x1xi32>
    %54 = tpu.iota {dimensions = array<i32: 1>} : vector<64x128xi32>
    %55 = vector.broadcast %53 : vector<64x1xi32> to vector<64x128xi32>
    %56 = arith.cmpi eq, %54, %55 : vector<64x128xi32>
    %cst_16 = arith.constant 0.000000e+00 : f32
    %57 = vector.shape_cast %41 : vector<64x1xf32> to vector<64x1xf32>
    %58 = vector.broadcast %57 : vector<64x1xf32> to vector<64x128xf32>
    %59 = vector.broadcast %cst_16 : f32 to vector<64x128xf32>
    %60 = arith.select %56, %58, %59 : vector<64x128xi1>, vector<64x128xf32>
    %cst_17 = arith.constant dense<0.000000e+00> : vector<128xf32>
    %61 = vector.multi_reduction <add>, %60, %cst_17 [0] : vector<64x128xf32> to vector<128xf32>
    %62 = vector.shape_cast %61 : vector<128xf32> to vector<1x128xf32>
    %cst_18 = arith.constant 0.000000e+00 : f32
    %63 = vector.shape_cast %43 : vector<64x1xf32> to vector<64x1xf32>
    %64 = vector.broadcast %63 : vector<64x1xf32> to vector<64x128xf32>
    %65 = vector.broadcast %cst_18 : f32 to vector<64x128xf32>
    %66 = arith.select %56, %64, %65 : vector<64x128xi1>, vector<64x128xf32>
    %cst_19 = arith.constant dense<0.000000e+00> : vector<128xf32>
    %67 = vector.multi_reduction <add>, %66, %cst_19 [0] : vector<64x128xf32> to vector<128xf32>
    %68 = vector.shape_cast %67 : vector<128xf32> to vector<1x128xf32>
    %69 = tpu.concatenate %62, %68 in 0 : vector<1x128xf32>, vector<1x128xf32> -> vector<2x128xf32>
    %c0_20 = arith.constant 0 : index
    %c0_21 = arith.constant 0 : index
    %70 = vector.load %arg5[%c0_20, %c0_21] : memref<2x128xf32, #tpu.memory_space<vmem>>, vector<2x128xf32>
    %71 = arith.addf %70, %69 : vector<2x128xf32>
    %c0_22 = arith.constant 0 : index
    %c0_23 = arith.constant 0 : index
    %72 = vector.load %arg5[%c0_22, %c0_23] : memref<2x128xf32, #tpu.memory_space<vmem>>, vector<2x128xf32>
    tpu.vector_store %arg5[%c0_22, %c0_23], %71 {strides = array<i32>} : memref<2x128xf32, #tpu.memory_space<vmem>>, vector<2x128xf32>,
    %c0_i32_24 = arith.constant 0 : i32
    %73 = arith.cmpi eq, %arg1, %c0_i32_24 : i32
    %74 = arith.extui %73 : i1 to i32
    %c0_i32_25 = arith.constant 0 : i32
    %75 = arith.cmpi ne, %74, %c0_i32_25 : i32
    scf.if %75 {
      %c0_26 = arith.constant 0 : index
      %c0_27 = arith.constant 0 : index
      %76 = vector.load %arg5[%c0_26, %c0_27] : memref<2x128xf32, #tpu.memory_space<vmem>>, vector<2x128xf32>
      %c0_28 = arith.constant 0 : index
      %c0_29 = arith.constant 0 : index
      %c0_30 = arith.constant 0 : index
      %77 = vector.load %arg4[%c0_28, %c0_29, %c0_30] : memref<1x2x128xf32, #tpu.memory_space<vmem>>, vector<1x2x128xf32>
      %78 = vector.shape_cast %77 : vector<1x2x128xf32> to vector<2x128xf32>
      %79 = vector.shape_cast %76 : vector<2x128xf32> to vector<1x2x128xf32>
      tpu.vector_store %arg4[%c0_28, %c0_29, %c0_30], %79 {strides = array<i32>} : memref<1x2x128xf32, #tpu.memory_space<vmem>>, vector<1x2x128xf32>,
    } else {
    }
    return
  }
  func.func @transform_0(%arg0: i32, %arg1: i32) -> (i32, i32) {
    %c1_i32 = arith.constant 1 : i32
    %0 = arith.muli %arg0, %c1_i32 : i32
    %1 = arith.addi %0, %arg1 : i32
    %c0_i32 = arith.constant 0 : i32
    %2 = arith.minsi %1, %c0_i32 : i32
    %c0_i32_0 = arith.constant 0 : i32
    %c0_i32_1 = arith.constant 0 : i32
    return %2, %c0_i32_0 : i32, i32
  }
  func.func @transform_1(%arg0: i32, %arg1: i32) -> (i32, i32) {
    %c1_i32 = arith.constant 1 : i32
    %0 = arith.muli %arg0, %c1_i32 : i32
    %1 = arith.addi %0, %arg1 : i32
    %c0_i32 = arith.constant 0 : i32
    %2 = arith.minsi %1, %c0_i32 : i32
    %c0_i32_0 = arith.constant 0 : i32
    %c0_i32_1 = arith.constant 0 : i32
    return %2, %c0_i32_0 : i32, i32
  }
  func.func @transform_2(%arg0: i32, %arg1: i32) -> (i32, i32, i32) {
    %c0_i32 = arith.constant 0 : i32
    %c0_i32_0 = arith.constant 0 : i32
    %c0_i32_1 = arith.constant 0 : i32
    return %arg0, %c0_i32, %c0_i32_0 : i32, i32, i32
  }
}

</mosaic_0001>

<llo_original>
// kernel: tpu_custom_call.1
$region0: #{tpu_custom_call.1}
  #allocation0 [shape = 'u32[]', space=smem, size = 0x4, offset = 0x4, fixed_abs, tag = 'smem constant byte address 0x4 - core index']
  #allocation1 [shape = 'u32[144,128]{1,0:T(1,128)}', space=vmem, size = 0x12000, scoped, tag = 'internal scratch']
  #allocation2 [shape = 'f32[2,128]{1,0:T(2,128)}', space=vmem, size = 0x400, scoped, tag = 'scratch operand']
  %s0 = inlined_call_operand.vmem [shape: f32[64,16], index: 0, kind: input, shape index: {}]
  %s1 = inlined_call_operand.vmem [shape: f32[64,16], index: 1, kind: input, shape index: {}]
  %s2 = inlined_call_operand.hbm [shape: f32[1,2,128], index: 2, kind: output, shape index: {}]
  %s3 = sld [smem:[#allocation0]]
  $region26: #{tpu_custom_call.1} parent=0
    _
  %s5 = ssub.s32 1, %s3
  %s6 = scalar_select 0, %s5, %s3
  $region1: #{tpu_custom_call.1} parent=0
    #allocation3 [shape = 'u8[1024]{0}', space=vmem, size = 0x400, scoped, tag = 'output window, operand 0, single buffered']
    #allocation4 [shape = 's32[1]{0}', space=sflag, size = 0x4, scoped, tag = 'scoped memory for tpu_custom_call.1']
    %7 = vsyncpa [#allocation4], 0
    // Predicated region
    $region2: #{tpu_custom_call.1} parent=1 // pred_check
      _
    $region3: #{tpu_custom_call.1} parent=1 // pred_check_branch
      %9 = sbr.rel (0) target = $region5
    $region4: #{tpu_custom_call.1} parent=1 // pred_region
      %s10 = sadd.s32 0, 0
      %p11 = scmp.lt.s32.totalorder %s10, 0
      %s12 = scalar_select %p11, %s10, 0
      %s13 = smul.u32 8, %s12
      %p14 = scmp.lt.s32.totalorder %s13, 7
      %s15 = scalar_select %p14, %s13, 7
      %s16 = smul.addr %s15, 8
      %s17 = scalar_lea.vmem %s0, %s16
      %s18 = sadd.s32 0, 0
      %p19 = scmp.lt.s32.totalorder %s18, 0
      %s20 = scalar_select %p19, %s18, 0
      %s21 = smul.u32 8, %s20
    $region5: #{tpu_custom_call.1} parent=1 // pred_fallthru
      _
    // Predicated region
    $region6: #{tpu_custom_call.1} parent=1 // pred_check
      _
    $region7: #{tpu_custom_call.1} parent=1 // pred_check_branch
      %23 = sbr.rel (0) target = $region9
    $region8: #{tpu_custom_call.1} parent=1 // pred_region
      %s24 = sadd.s32 0, 0
      %p25 = scmp.lt.s32.totalorder %s24, 0
      %s26 = scalar_select %p25, %s24, 0
      %s27 = smul.u32 8, %s26
      %p28 = scmp.lt.s32.totalorder %s27, 7
      %s29 = scalar_select %p28, %s27, 7
      %s30 = smul.addr %s29, 8
      %s31 = scalar_lea.vmem %s1, %s30
      %s32 = sadd.s32 0, 0
      %p33 = scmp.lt.s32.totalorder %s32, 0
      %s34 = scalar_select %p33, %s32, 0
      %s35 = smul.u32 8, %s34
    $region9: #{tpu_custom_call.1} parent=1 // pred_fallthru
      _
    %s36 = sadd.s32 0, 0
    %p37 = scmp.lt.s32.totalorder %s36, 0
    %s38 = scalar_select %p37, %s36, 0
    %s39 = smul.u32 8, %s38
    %p40 = scmp.lt.s32.totalorder %s39, 7
    %s41 = scalar_select %p40, %s39, 7
    %s42 = smul.addr %s41, 8
    %s43 = scalar_lea.vmem %s0, %s42
    %s44 = sadd.s32 0, 0
    %p45 = scmp.lt.s32.totalorder %s44, 0
    %s46 = scalar_select %p45, %s44, 0
    %s47 = smul.u32 8, %s46
    %p48 = scmp.lt.s32.totalorder %s47, 7
    %s49 = scalar_select %p48, %s47, 7
    %s50 = smul.addr %s49, 8
    %s51 = scalar_lea.vmem %s1, %s50
    %s52 = sadd.s32 0, 0
    %p53 = scmp.lt.s32.totalorder %s52, 0
    %s54 = scalar_select %p53, %s52, 0
    %s55 = smul.u32 8, %s54
    %p56 = scmp.lt.s32.totalorder %s55, 7
    %s57 = scalar_select %p56, %s55, 7
    %s58 = smul.addr %s57, 8
    %s59 = scalar_lea.vmem %s0, %s58
    %s60 = sadd.s32 0, 0
    %p61 = scmp.lt.s32.totalorder %s60, 0
    %s62 = scalar_select %p61, %s60, 0
    %s63 = smul.u32 8, %s62
    %s64 = sadd.s32 0, 0
    %p65 = scmp.lt.s32.totalorder %s64, 0
    %s66 = scalar_select %p65, %s64, 0
    %s67 = smul.u32 8, %s66
    %p68 = scmp.lt.s32.totalorder %s67, 7
    %s69 = scalar_select %p68, %s67, 7
    %s70 = smul.addr %s69, 8
    %s71 = scalar_lea.vmem %s1, %s70
    %s72 = sadd.s32 0, 0
    %p73 = scmp.lt.s32.totalorder %s72, 0
    %s74 = scalar_select %p73, %s72, 0
    %s75 = smul.u32 8, %s74
    %p76 = scmp.eq.s32.totalorder 0, 0
    // Predicated region
    $region10: #{tpu_custom_call.1} parent=1 // pred_check
      %p77 = pneg %p76
    $region11: #{tpu_custom_call.1} parent=1 // pred_check_branch
      %79 = sbr.rel (%p77) target = $region13
    $region12: #{tpu_custom_call.1} parent=1 // pred_region
      %80 = vst [vmem:[#allocation2] sm:$0x3] 0.0
    $region13: #{tpu_custom_call.1} parent=1 // pred_fallthru
      _
    %v81 = vld [vmem:[%s59] sm:$0xff]
    %v82 = vld [vmem:[%s59 + $0x8] sm:$0xff]
    %v83 = vld [vmem:[%s59 + $0x10] sm:$0xff]
    %v84 = vld [vmem:[%s59 + $0x18] sm:$0xff]
    %v85 = vld [vmem:[%s59 + $0x20] sm:$0xff]
    %v86 = vld [vmem:[%s59 + $0x28] sm:$0xff]
    %v87 = vld [vmem:[%s59 + $0x30] sm:$0xff]
    %v88 = vld [vmem:[%s59 + $0x38] sm:$0xff]
    %v89 = vld [vmem:[%s71] sm:$0xff]
    %v90 = vld [vmem:[%s71 + $0x8] sm:$0xff]
    %v91 = vld [vmem:[%s71 + $0x10] sm:$0xff]
    %v92 = vld [vmem:[%s71 + $0x18] sm:$0xff]
    %v93 = vld [vmem:[%s71 + $0x20] sm:$0xff]
    %v94 = vld [vmem:[%s71 + $0x28] sm:$0xff]
    %v95 = vld [vmem:[%s71 + $0x30] sm:$0xff]
    %v96 = vld [vmem:[%s71 + $0x38] sm:$0xff]
    %vm97 = vcmask 130048
    %v98 = vsel %vm97, %v81, -inf
    %99 = vmax.xlane.f32.xlu0 %v98
    %v100 = vpop.xlane.xlu0 %99
    %v101 = vsel %vm97, %v82, -inf
    %102 = vmax.xlane.f32.xlu0 %v101
    %v103 = vpop.xlane.xlu0 %102
    %v104 = vsel %vm97, %v83, -inf
    %105 = vmax.xlane.f32.xlu0 %v104
    %v106 = vpop.xlane.xlu0 %105
    %v107 = vsel %vm97, %v84, -inf
    %108 = vmax.xlane.f32.xlu0 %v107
    %v109 = vpop.xlane.xlu0 %108
    %v110 = vsel %vm97, %v85, -inf
    %111 = vmax.xlane.f32.xlu0 %v110
    %v112 = vpop.xlane.xlu0 %111
    %v113 = vsel %vm97, %v86, -inf
    %114 = vmax.xlane.f32.xlu0 %v113
    %v115 = vpop.xlane.xlu0 %114
    %v116 = vsel %vm97, %v87, -inf
    %117 = vmax.xlane.f32.xlu0 %v116
    %v118 = vpop.xlane.xlu0 %117
    %v119 = vsel %vm97, %v88, -inf
    %120 = vmax.xlane.f32.xlu0 %v119
    %v121 = vpop.xlane.xlu0 %120
    %v122 = vsub.f32 %v81, %v100
    %v123 = vsub.f32 %v82, %v103
    %v124 = vsub.f32 %v83, %v106
    %v125 = vsub.f32 %v84, %v109
    %v126 = vsub.f32 %v85, %v112
    %v127 = vsub.f32 %v86, %v115
    %v128 = vsub.f32 %v87, %v118
    %v129 = vsub.f32 %v88, %v121
    %v130 = vmul.f32 %v122, 1.442695
    %v131 = vpow.pop %v130
    %v132 = vmul.f32 %v123, 1.442695
    %v133 = vpow.pop %v132
    %v134 = vmul.f32 %v124, 1.442695
    %v135 = vpow.pop %v134
    %v136 = vmul.f32 %v125, 1.442695
    %v137 = vpow.pop %v136
    %v138 = vmul.f32 %v126, 1.442695
    %v139 = vpow.pop %v138
    %v140 = vmul.f32 %v127, 1.442695
    %v141 = vpow.pop %v140
    %v142 = vmul.f32 %v128, 1.442695
    %v143 = vpow.pop %v142
    %v144 = vmul.f32 %v129, 1.442695
    %v145 = vpow.pop %v144
    %v146 = vsel %vm97, %v131, 0.0
    %147 = vadd.xlane.f32.xlu0 %v146
    %v148 = vpop.xlane.xlu0 %147
    %v149 = vsel %vm97, %v133, 0.0
    %150 = vadd.xlane.f32.xlu0 %v149
    %v151 = vpop.xlane.xlu0 %150
    %v152 = vsel %vm97, %v135, 0.0
    %153 = vadd.xlane.f32.xlu0 %v152
    %v154 = vpop.xlane.xlu0 %153
    %v155 = vsel %vm97, %v137, 0.0
    %156 = vadd.xlane.f32.xlu0 %v155
    %v157 = vpop.xlane.xlu0 %156
    %v158 = vsel %vm97, %v139, 0.0
    %159 = vadd.xlane.f32.xlu0 %v158
    %v160 = vpop.xlane.xlu0 %159
    %v161 = vsel %vm97, %v141, 0.0
    %162 = vadd.xlane.f32.xlu0 %v161
    %v163 = vpop.xlane.xlu0 %162
    %v164 = vsel %vm97, %v143, 0.0
    %165 = vadd.xlane.f32.xlu0 %v164
    %v166 = vpop.xlane.xlu0 %165
    %v167 = vsel %vm97, %v145, 0.0
    %168 = vadd.xlane.f32.xlu0 %v167
    %v169 = vpop.xlane.xlu0 %168
    %v170 = vrcp.pop %v148
    %v171 = vmul.f32 1.0, %v170
    %v172 = vrcp.pop %v151
    %v173 = vmul.f32 1.0, %v172
    %v174 = vrcp.pop %v154
    %v175 = vmul.f32 1.0, %v174
    %v176 = vrcp.pop %v157
    %v177 = vmul.f32 1.0, %v176
    %v178 = vrcp.pop %v160
    %v179 = vmul.f32 1.0, %v178
    %v180 = vrcp.pop %v163
    %v181 = vmul.f32 1.0, %v180
    %v182 = vrcp.pop %v166
    %v183 = vmul.f32 1.0, %v182
    %v184 = vrcp.pop %v169
    %v185 = vmul.f32 1.0, %v184
    %v186 = vlaneseq
    %v187 = vand.u32 %v186, 127
    %vm188 = vcmp.eq.f32.partialorder %v81, %v100
    %vm189 = vcmp.eq.f32.partialorder %v82, %v103
    %vm190 = vcmp.eq.f32.partialorder %v83, %v106
    %vm191 = vcmp.eq.f32.partialorder %v84, %v109
    %vm192 = vcmp.eq.f32.partialorder %v85, %v112
    %vm193 = vcmp.eq.f32.partialorder %v86, %v115
    %vm194 = vcmp.eq.f32.partialorder %v87, %v118
    %vm195 = vcmp.eq.f32.partialorder %v88, %v121
    %v196 = vsel %vm188, %v187, 16
    %v197 = vsel %vm189, %v187, 16
    %v198 = vsel %vm190, %v187, 16
    %v199 = vsel %vm191, %v187, 16
    %v200 = vsel %vm192, %v187, 16
    %v201 = vsel %vm193, %v187, 16
    %v202 = vsel %vm194, %v187, 16
    %v203 = vsel %vm195, %v187, 16
    %v204 = vsel %vm97, %v196, 2147483647
    %v205 = vand.u32 %v204, 65535
    %v206 = vshra.s32 %v204, 16
    %v207 = vcvt.s32.f32 %v205
    %v208 = vcvt.s32.f32 %v206
    %209 = vmin.xlane.f32.xlu0 %v208
    %v210 = vpop.xlane.xlu0 %209
    %vm211 = vcmp.eq.f32.partialorder %v208, %v210
    %v212 = vsel %vm211, %v207, inf
    %213 = vmin.xlane.f32.xlu0 %v212
    %v214 = vpop.xlane.xlu0 %213
    %v215 = vcvt.f32.s32 %v214
    %v216 = vcvt.f32.s32 %v210
    %v217 = vshll.u32 %v216, 16
    %v218 = vadd.s32 %v217, %v215
    %v219 = vsel %vm97, %v197, 2147483647
    %v220 = vand.u32 %v219, 65535
    %v221 = vshra.s32 %v219, 16
    %v222 = vcvt.s32.f32 %v220
    %v223 = vcvt.s32.f32 %v221
    %224 = vmin.xlane.f32.xlu0 %v223
    %v225 = vpop.xlane.xlu0 %224
    %vm226 = vcmp.eq.f32.partialorder %v223, %v225
    %v227 = vsel %vm226, %v222, inf
    %228 = vmin.xlane.f32.xlu0 %v227
    %v229 = vpop.xlane.xlu0 %228
    %v230 = vcvt.f32.s32 %v229
    %v231 = vcvt.f32.s32 %v225
    %v232 = vshll.u32 %v231, 16
    %v233 = vadd.s32 %v232, %v230
    %v234 = vsel %vm97, %v198, 2147483647
    %v235 = vand.u32 %v234, 65535
    %v236 = vshra.s32 %v234, 16
    %v237 = vcvt.s32.f32 %v235
    %v238 = vcvt.s32.f32 %v236
    %239 = vmin.xlane.f32.xlu0 %v238
    %v240 = vpop.xlane.xlu0 %239
    %vm241 = vcmp.eq.f32.partialorder %v238, %v240
    %v242 = vsel %vm241, %v237, inf
    %243 = vmin.xlane.f32.xlu0 %v242
    %v244 = vpop.xlane.xlu0 %243
    %v245 = vcvt.f32.s32 %v244
    %v246 = vcvt.f32.s32 %v240
    %v247 = vshll.u32 %v246, 16
    %v248 = vadd.s32 %v247, %v245
    %v249 = vsel %vm97, %v199, 2147483647
    %v250 = vand.u32 %v249, 65535
    %v251 = vshra.s32 %v249, 16
    %v252 = vcvt.s32.f32 %v250
    %v253 = vcvt.s32.f32 %v251
    %254 = vmin.xlane.f32.xlu0 %v253
    %v255 = vpop.xlane.xlu0 %254
    %vm256 = vcmp.eq.f32.partialorder %v253, %v255
    %v257 = vsel %vm256, %v252, inf
    %258 = vmin.xlane.f32.xlu0 %v257
    %v259 = vpop.xlane.xlu0 %258
    %v260 = vcvt.f32.s32 %v259
    %v261 = vcvt.f32.s32 %v255
    %v262 = vshll.u32 %v261, 16
    %v263 = vadd.s32 %v262, %v260
    %v264 = vsel %vm97, %v200, 2147483647
    %v265 = vand.u32 %v264, 65535
    %v266 = vshra.s32 %v264, 16
    %v267 = vcvt.s32.f32 %v265
    %v268 = vcvt.s32.f32 %v266
    %269 = vmin.xlane.f32.xlu0 %v268
    %v270 = vpop.xlane.xlu0 %269
    %vm271 = vcmp.eq.f32.partialorder %v268, %v270
    %v272 = vsel %vm271, %v267, inf
    %273 = vmin.xlane.f32.xlu0 %v272
    %v274 = vpop.xlane.xlu0 %273
    %v275 = vcvt.f32.s32 %v274
    %v276 = vcvt.f32.s32 %v270
    %v277 = vshll.u32 %v276, 16
    %v278 = vadd.s32 %v277, %v275
    %v279 = vsel %vm97, %v201, 2147483647
    %v280 = vand.u32 %v279, 65535
    %v281 = vshra.s32 %v279, 16
    %v282 = vcvt.s32.f32 %v280
    %v283 = vcvt.s32.f32 %v281
    %284 = vmin.xlane.f32.xlu0 %v283
    %v285 = vpop.xlane.xlu0 %284
    %vm286 = vcmp.eq.f32.partialorder %v283, %v285
    %v287 = vsel %vm286, %v282, inf
    %288 = vmin.xlane.f32.xlu0 %v287
    %v289 = vpop.xlane.xlu0 %288
    %v290 = vcvt.f32.s32 %v289
    %v291 = vcvt.f32.s32 %v285
    %v292 = vshll.u32 %v291, 16
    %v293 = vadd.s32 %v292, %v290
    %v294 = vsel %vm97, %v202, 2147483647
    %v295 = vand.u32 %v294, 65535
    %v296 = vshra.s32 %v294, 16
    %v297 = vcvt.s32.f32 %v295
    %v298 = vcvt.s32.f32 %v296
    %299 = vmin.xlane.f32.xlu0 %v298
    %v300 = vpop.xlane.xlu0 %299
    %vm301 = vcmp.eq.f32.partialorder %v298, %v300
    %v302 = vsel %vm301, %v297, inf
    %303 = vmin.xlane.f32.xlu0 %v302
    %v304 = vpop.xlane.xlu0 %303
    %v305 = vcvt.f32.s32 %v304
    %v306 = vcvt.f32.s32 %v300
    %v307 = vshll.u32 %v306, 16
    %v308 = vadd.s32 %v307, %v305
    %v309 = vsel %vm97, %v203, 2147483647
    %v310 = vand.u32 %v309, 65535
    %v311 = vshra.s32 %v309, 16
    %v312 = vcvt.s32.f32 %v310
    %v313 = vcvt.s32.f32 %v311
    %314 = vmin.xlane.f32.xlu0 %v313
    %v315 = vpop.xlane.xlu0 %314
    %vm316 = vcmp.eq.f32.partialorder %v313, %v315
    %v317 = vsel %vm316, %v312, inf
    %318 = vmin.xlane.f32.xlu0 %v317
    %v319 = vpop.xlane.xlu0 %318
    %v320 = vcvt.f32.s32 %v319
    %v321 = vcvt.f32.s32 %v315
    %v322 = vshll.u32 %v321, 16
    %v323 = vadd.s32 %v322, %v320
    %v324 = vsel %vm97, %v89, -inf
    %325 = vmax.xlane.f32.xlu0 %v324
    %v326 = vpop.xlane.xlu0 %325
    %v327 = vsel %vm97, %v90, -inf
    %328 = vmax.xlane.f32.xlu0 %v327
    %v329 = vpop.xlane.xlu0 %328
    %v330 = vsel %vm97, %v91, -inf
    %331 = vmax.xlane.f32.xlu0 %v330
    %v332 = vpop.xlane.xlu0 %331
    %v333 = vsel %vm97, %v92, -inf
    %334 = vmax.xlane.f32.xlu0 %v333
    %v335 = vpop.xlane.xlu0 %334
    %v336 = vsel %vm97, %v93, -inf
    %337 = vmax.xlane.f32.xlu0 %v336
    %v338 = vpop.xlane.xlu0 %337
    %v339 = vsel %vm97, %v94, -inf
    %340 = vmax.xlane.f32.xlu0 %v339
    %v341 = vpop.xlane.xlu0 %340
    %v342 = vsel %vm97, %v95, -inf
    %343 = vmax.xlane.f32.xlu0 %v342
    %v344 = vpop.xlane.xlu0 %343
    %v345 = vsel %vm97, %v96, -inf
    %346 = vmax.xlane.f32.xlu0 %v345
    %v347 = vpop.xlane.xlu0 %346
    %vm348 = vcmp.eq.f32.partialorder %v89, %v326
    %vm349 = vcmp.eq.f32.partialorder %v90, %v329
    %vm350 = vcmp.eq.f32.partialorder %v91, %v332
    %vm351 = vcmp.eq.f32.partialorder %v92, %v335
    %vm352 = vcmp.eq.f32.partialorder %v93, %v338
    %vm353 = vcmp.eq.f32.partialorder %v94, %v341
    %vm354 = vcmp.eq.f32.partialorder %v95, %v344
    %vm355 = vcmp.eq.f32.partialorder %v96, %v347
    %v356 = vsel %vm348, %v187, 16
    %v357 = vsel %vm349, %v187, 16
    %v358 = vsel %vm350, %v187, 16
    %v359 = vsel %vm351, %v187, 16
    %v360 = vsel %vm352, %v187, 16
    %v361 = vsel %vm353, %v187, 16
    %v362 = vsel %vm354, %v187, 16
    %v363 = vsel %vm355, %v187, 16
    %v364 = vsel %vm97, %v356, 2147483647
    %v365 = vand.u32 %v364, 65535
    %v366 = vshra.s32 %v364, 16
    %v367 = vcvt.s32.f32 %v365
    %v368 = vcvt.s32.f32 %v366
    %369 = vmin.xlane.f32.xlu0 %v368
    %v370 = vpop.xlane.xlu0 %369
    %vm371 = vcmp.eq.f32.partialorder %v368, %v370
    %v372 = vsel %vm371, %v367, inf
    %373 = vmin.xlane.f32.xlu0 %v372
    %v374 = vpop.xlane.xlu0 %373
    %v375 = vcvt.f32.s32 %v374
    %v376 = vcvt.f32.s32 %v370
    %v377 = vshll.u32 %v376, 16
    %v378 = vadd.s32 %v377, %v375
    %v379 = vsel %vm97, %v357, 2147483647
    %v380 = vand.u32 %v379, 65535
    %v381 = vshra.s32 %v379, 16
    %v382 = vcvt.s32.f32 %v380
    %v383 = vcvt.s32.f32 %v381
    %384 = vmin.xlane.f32.xlu0 %v383
    %v385 = vpop.xlane.xlu0 %384
    %vm386 = vcmp.eq.f32.partialorder %v383, %v385
    %v387 = vsel %vm386, %v382, inf
    %388 = vmin.xlane.f32.xlu0 %v387
    %v389 = vpop.xlane.xlu0 %388
    %v390 = vcvt.f32.s32 %v389
    %v391 = vcvt.f32.s32 %v385
    %v392 = vshll.u32 %v391, 16
    %v393 = vadd.s32 %v392, %v390
    %v394 = vsel %vm97, %v358, 2147483647
    %v395 = vand.u32 %v394, 65535
    %v396 = vshra.s32 %v394, 16
    %v397 = vcvt.s32.f32 %v395
    %v398 = vcvt.s32.f32 %v396
    %399 = vmin.xlane.f32.xlu0 %v398
    %v400 = vpop.xlane.xlu0 %399
    %vm401 = vcmp.eq.f32.partialorder %v398, %v400
    %v402 = vsel %vm401, %v397, inf
    %403 = vmin.xlane.f32.xlu0 %v402
    %v404 = vpop.xlane.xlu0 %403
    %v405 = vcvt.f32.s32 %v404
    %v406 = vcvt.f32.s32 %v400
    %v407 = vshll.u32 %v406, 16
    %v408 = vadd.s32 %v407, %v405
    %v409 = vsel %vm97, %v359, 2147483647
    %v410 = vand.u32 %v409, 65535
    %v411 = vshra.s32 %v409, 16
    %v412 = vcvt.s32.f32 %v410
    %v413 = vcvt.s32.f32 %v411
    %414 = vmin.xlane.f32.xlu0 %v413
    %v415 = vpop.xlane.xlu0 %414
    %vm416 = vcmp.eq.f32.partialorder %v413, %v415
    %v417 = vsel %vm416, %v412, inf
    %418 = vmin.xlane.f32.xlu0 %v417
    %v419 = vpop.xlane.xlu0 %418
    %v420 = vcvt.f32.s32 %v419
    %v421 = vcvt.f32.s32 %v415
    %v422 = vshll.u32 %v421, 16
    %v423 = vadd.s32 %v422, %v420
    %v424 = vsel %vm97, %v360, 2147483647
    %v425 = vand.u32 %v424, 65535
    %v426 = vshra.s32 %v424, 16
    %v427 = vcvt.s32.f32 %v425
    %v428 = vcvt.s32.f32 %v426
    %429 = vmin.xlane.f32.xlu0 %v428
    %v430 = vpop.xlane.xlu0 %429
    %vm431 = vcmp.eq.f32.partialorder %v428, %v430
    %v432 = vsel %vm431, %v427, inf
    %433 = vmin.xlane.f32.xlu0 %v432
    %v434 = vpop.xlane.xlu0 %433
    %v435 = vcvt.f32.s32 %v434
    %v436 = vcvt.f32.s32 %v430
    %v437 = vshll.u32 %v436, 16
    %v438 = vadd.s32 %v437, %v435
    %v439 = vsel %vm97, %v361, 2147483647
    %v440 = vand.u32 %v439, 65535
    %v441 = vshra.s32 %v439, 16
    %v442 = vcvt.s32.f32 %v440
    %v443 = vcvt.s32.f32 %v441
    %444 = vmin.xlane.f32.xlu0 %v443
    %v445 = vpop.xlane.xlu0 %444
    %vm446 = vcmp.eq.f32.partialorder %v443, %v445
    %v447 = vsel %vm446, %v442, inf
    %448 = vmin.xlane.f32.xlu0 %v447
    %v449 = vpop.xlane.xlu0 %448
    %v450 = vcvt.f32.s32 %v449
    %v451 = vcvt.f32.s32 %v445
    %v452 = vshll.u32 %v451, 16
    %v453 = vadd.s32 %v452, %v450
    %v454 = vsel %vm97, %v362, 2147483647
    %v455 = vand.u32 %v454, 65535
    %v456 = vshra.s32 %v454, 16
    %v457 = vcvt.s32.f32 %v455
    %v458 = vcvt.s32.f32 %v456
    %459 = vmin.xlane.f32.xlu0 %v458
    %v460 = vpop.xlane.xlu0 %459
    %vm461 = vcmp.eq.f32.partialorder %v458, %v460
    %v462 = vsel %vm461, %v457, inf
    %463 = vmin.xlane.f32.xlu0 %v462
    %v464 = vpop.xlane.xlu0 %463
    %v465 = vcvt.f32.s32 %v464
    %v466 = vcvt.f32.s32 %v460
    %v467 = vshll.u32 %v466, 16
    %v468 = vadd.s32 %v467, %v465
    %v469 = vsel %vm97, %v363, 2147483647
    %v470 = vand.u32 %v469, 65535
    %v471 = vshra.s32 %v469, 16
    %v472 = vcvt.s32.f32 %v470
    %v473 = vcvt.s32.f32 %v471
    %474 = vmin.xlane.f32.xlu0 %v473
    %v475 = vpop.xlane.xlu0 %474
    %vm476 = vcmp.eq.f32.partialorder %v473, %v475
    %v477 = vsel %vm476, %v472, inf
    %478 = vmin.xlane.f32.xlu0 %v477
    %v479 = vpop.xlane.xlu0 %478
    %v480 = vcvt.f32.s32 %v479
    %v481 = vcvt.f32.s32 %v475
    %v482 = vshll.u32 %v481, 16
    %v483 = vadd.s32 %v482, %v480
    %vm484 = vcmp.eq.s32.totalorder %v218, %v378
    %vm485 = vcmp.eq.s32.totalorder %v233, %v393
    %vm486 = vcmp.eq.s32.totalorder %v248, %v408
    %vm487 = vcmp.eq.s32.totalorder %v263, %v423
    %vm488 = vcmp.eq.s32.totalorder %v278, %v438
    %vm489 = vcmp.eq.s32.totalorder %v293, %v453
    %vm490 = vcmp.eq.s32.totalorder %v308, %v468
    %vm491 = vcmp.eq.s32.totalorder %v323, %v483
    %v492 = vsel %vm484, 1, 0
    %v493 = vsel %vm485, 1, 0
    %v494 = vsel %vm486, 1, 0
    %v495 = vsel %vm487, 1, 0
    %v496 = vsel %vm488, 1, 0
    %v497 = vsel %vm489, 1, 0
    %v498 = vsel %vm490, 1, 0
    %v499 = vsel %vm491, 1, 0
    %v500 = vcvt.s32.f32 %v492
    %v501 = vcvt.s32.f32 %v493
    %v502 = vcvt.s32.f32 %v494
    %v503 = vcvt.s32.f32 %v495
    %v504 = vcvt.s32.f32 %v496
    %v505 = vcvt.s32.f32 %v497
    %v506 = vcvt.s32.f32 %v498
    %v507 = vcvt.s32.f32 %v499
    %v508 = vlaneseq
    %v509 = vshrl.u32 %v508, 7
    %v510 = vadd.s32 %v509, 8
    %v511 = vadd.s32 %v509, 16
    %v512 = vadd.s32 %v509, 24
    %v513 = vadd.s32 %v509, 32
    %v514 = vadd.s32 %v509, 40
    %v515 = vadd.s32 %v509, 48
    %v516 = vadd.s32 %v509, 56
    %s517 = sadd.s32 0, 0
    %s518 = smul.u32 %s517, 64
    %v519 = vstv %s518
    %v520 = vadd.s32 %v519, %v509
    %v521 = vadd.s32 %v519, %v510
    %v522 = vadd.s32 %v519, %v511
    %v523 = vadd.s32 %v519, %v512
    %v524 = vadd.s32 %v519, %v513
    %v525 = vadd.s32 %v519, %v514
    %v526 = vadd.s32 %v519, %v515
    %v527 = vadd.s32 %v519, %v516
    %vm528 = vcmp.lt.s32.totalorder %v520, 64
    %vm529 = vcmp.lt.s32.totalorder %v521, 64
    %vm530 = vcmp.lt.s32.totalorder %v522, 64
    %vm531 = vcmp.lt.s32.totalorder %v523, 64
    %vm532 = vcmp.lt.s32.totalorder %v524, 64
    %vm533 = vcmp.lt.s32.totalorder %v525, 64
    %vm534 = vcmp.lt.s32.totalorder %v526, 64
    %vm535 = vcmp.lt.s32.totalorder %v527, 64
    %v536 = vsel %vm528, %v171, 0.0
    %v537 = vsel %vm529, %v173, 0.0
    %v538 = vsel %vm530, %v175, 0.0
    %v539 = vsel %vm531, %v177, 0.0
    %v540 = vsel %vm532, %v179, 0.0
    %v541 = vsel %vm533, %v181, 0.0
    %v542 = vsel %vm534, %v183, 0.0
    %v543 = vsel %vm535, %v185, 0.0
    %v544 = vsel %vm528, %v500, 0.0
    %v545 = vsel %vm529, %v501, 0.0
    %v546 = vsel %vm530, %v502, 0.0
    %v547 = vsel %vm531, %v503, 0.0
    %v548 = vsel %vm532, %v504, 0.0
    %v549 = vsel %vm533, %v505, 0.0
    %v550 = vsel %vm534, %v506, 0.0
    %v551 = vsel %vm535, %v507, 0.0
    %v552 = vmul.f32 %v171, 15.0
    %v553 = vmul.f32 %v173, 15.0
    %v554 = vmul.f32 %v175, 15.0
    %v555 = vmul.f32 %v177, 15.0
    %v556 = vmul.f32 %v179, 15.0
    %v557 = vmul.f32 %v181, 15.0
    %v558 = vmul.f32 %v183, 15.0
    %v559 = vmul.f32 %v185, 15.0
    %v560 = vceil.f32 %v552
    %v561 = vceil.f32 %v553
    %v562 = vceil.f32 %v554
    %v563 = vceil.f32 %v555
    %v564 = vceil.f32 %v556
    %v565 = vceil.f32 %v557
    %v566 = vceil.f32 %v558
    %v567 = vceil.f32 %v559
    %v568 = vcvt.f32.s32.to.zero.pseudo %v560
    %v569 = vcvt.f32.s32.to.zero.pseudo %v561
    %v570 = vcvt.f32.s32.to.zero.pseudo %v562
    %v571 = vcvt.f32.s32.to.zero.pseudo %v563
    %v572 = vcvt.f32.s32.to.zero.pseudo %v564
    %v573 = vcvt.f32.s32.to.zero.pseudo %v565
    %v574 = vcvt.f32.s32.to.zero.pseudo %v566
    %v575 = vcvt.f32.s32.to.zero.pseudo %v567
    %v576 = vsub.s32 %v568, 1
    %v577 = vsub.s32 %v569, 1
    %v578 = vsub.s32 %v570, 1
    %v579 = vsub.s32 %v571, 1
    %v580 = vsub.s32 %v572, 1
    %v581 = vsub.s32 %v573, 1
    %v582 = vsub.s32 %v574, 1
    %v583 = vsub.s32 %v575, 1
    %vm584 = vcmp.gt.s32.totalorder %v576, 0
    %v585 = vsel %vm584, %v576, 0
    %vm586 = vcmp.gt.s32.totalorder %v577, 0
    %v587 = vsel %vm586, %v577, 0
    %vm588 = vcmp.gt.s32.totalorder %v578, 0
    %v589 = vsel %vm588, %v578, 0
    %vm590 = vcmp.gt.s32.totalorder %v579, 0
    %v591 = vsel %vm590, %v579, 0
    %vm592 = vcmp.gt.s32.totalorder %v580, 0
    %v593 = vsel %vm592, %v580, 0
    %vm594 = vcmp.gt.s32.totalorder %v581, 0
    %v595 = vsel %vm594, %v581, 0
    %vm596 = vcmp.gt.s32.totalorder %v582, 0
    %v597 = vsel %vm596, %v582, 0
    %vm598 = vcmp.gt.s32.totalorder %v583, 0
    %v599 = vsel %vm598, %v583, 0
    %vm600 = vcmp.lt.s32.totalorder %v585, 14
    %v601 = vsel %vm600, %v585, 14
    %vm602 = vcmp.lt.s32.totalorder %v587, 14
    %v603 = vsel %vm602, %v587, 14
    %vm604 = vcmp.lt.s32.totalorder %v589, 14
    %v605 = vsel %vm604, %v589, 14
    %vm606 = vcmp.lt.s32.totalorder %v591, 14
    %v607 = vsel %vm606, %v591, 14
    %vm608 = vcmp.lt.s32.totalorder %v593, 14
    %v609 = vsel %vm608, %v593, 14
    %vm610 = vcmp.lt.s32.totalorder %v595, 14
    %v611 = vsel %vm610, %v595, 14
    %vm612 = vcmp.lt.s32.totalorder %v597, 14
    %v613 = vsel %vm612, %v597, 14
    %vm614 = vcmp.lt.s32.totalorder %v599, 14
    %v615 = vsel %vm614, %v599, 14
    %vm616 = vcmp.eq.s32.totalorder %v187, %v601
    %vm617 = vcmp.eq.s32.totalorder %v187, %v603
    %vm618 = vcmp.eq.s32.totalorder %v187, %v605
    %vm619 = vcmp.eq.s32.totalorder %v187, %v607
    %vm620 = vcmp.eq.s32.totalorder %v187, %v609
    %vm621 = vcmp.eq.s32.totalorder %v187, %v611
    %vm622 = vcmp.eq.s32.totalorder %v187, %v613
    %vm623 = vcmp.eq.s32.totalorder %v187, %v615
    %v624 = vsel %vm616, %v536, 0.0
    %v625 = vsel %vm617, %v537, 0.0
    %v626 = vsel %vm618, %v538, 0.0
    %v627 = vsel %vm619, %v539, 0.0
    %v628 = vsel %vm620, %v540, 0.0
    %v629 = vsel %vm621, %v541, 0.0
    %v630 = vsel %vm622, %v542, 0.0
    %v631 = vsel %vm623, %v543, 0.0
    %v632 = vadd.f32 %v624, %v625
    %v633 = vadd.f32 %v632, %v626
    %v634 = vadd.f32 %v633, %v627
    %v635 = vadd.f32 %v634, %v628
    %v636 = vadd.f32 %v635, %v629
    %v637 = vadd.f32 %v636, %v630
    %v638 = vadd.f32 %v637, %v631
    %v639 = vrot.slane %v638, 4
    %v640 = vadd.f32 %v638, %v639
    %v641 = vrot.slane %v640, 2
    %v642 = vadd.f32 %v640, %v641
    %v643 = vrot.slane %v642, 1
    %v644 = vadd.f32 %v642, %v643
    %v645 = vsel %vm616, %v544, 0.0
    %v646 = vsel %vm617, %v545, 0.0
    %v647 = vsel %vm618, %v546, 0.0
    %v648 = vsel %vm619, %v547, 0.0
    %v649 = vsel %vm620, %v548, 0.0
    %v650 = vsel %vm621, %v549, 0.0
    %v651 = vsel %vm622, %v550, 0.0
    %v652 = vsel %vm623, %v551, 0.0
    %v653 = vadd.f32 %v645, %v646
    %v654 = vadd.f32 %v653, %v647
    %v655 = vadd.f32 %v654, %v648
    %v656 = vadd.f32 %v655, %v649
    %v657 = vadd.f32 %v656, %v650
    %v658 = vadd.f32 %v657, %v651
    %v659 = vadd.f32 %v658, %v652
    %v660 = vrot.slane %v659, 4
    %v661 = vadd.f32 %v659, %v660
    %v662 = vrot.slane %v661, 2
    %v663 = vadd.f32 %v661, %v662
    %v664 = vrot.slane %v663, 1
    %v665 = vadd.f32 %v663, %v664
    %vm666 = vcmask 1040384
    %v667 = vsel %vm666, %v644, %v665
    %v668 = vld [vmem:[#allocation2] sm:$0x3]
    %v669 = vadd.f32 %v668, %v667
    %670 = vst [vmem:[#allocation2] sm:$0x3] %v669
    // Predicated region
    $region14: #{tpu_custom_call.1} parent=1 // pred_check
      %p671 = pneg %p76
    $region15: #{tpu_custom_call.1} parent=1 // pred_check_branch
      %673 = sbr.rel (%p671) target = $region17
    $region16: #{tpu_custom_call.1} parent=1 // pred_region
      %v674 = vld [vmem:[#allocation2] sm:$0x3]
      %675 = vst [vmem:[#allocation3] sm:$0x3] %v674
    $region17: #{tpu_custom_call.1} parent=1 // pred_fallthru
      _
    // Predicated region
    $region18: #{tpu_custom_call.1} parent=1 // pred_check
      _
    $region19: #{tpu_custom_call.1} parent=1 // pred_check_branch
      %677 = sbr.rel (0) target = $region21
    $region20: #{tpu_custom_call.1} parent=1 // pred_region
      %s679 = ssub.s32 32, 32
      %680 = vsyncadd [#allocation4], %s679
      %s682 = sshll.u32 [#allocation3], 4
      %s683 = int_to_ptr.vmem [resolvable:$true] %s682
      %685 = dma.vmem_to_hbm [thread:$0]  %s683, 32, %s2, [#allocation4]
    $region21: #{tpu_custom_call.1} parent=1 // pred_fallthru
      _
    // Predicated region
    $region22: #{tpu_custom_call.1} parent=1 // pred_check
      _
    $region23: #{tpu_custom_call.1} parent=1 // pred_check_branch
      %687 = sbr.rel (0) target = $region25
    $region24: #{tpu_custom_call.1} parent=1 // pred_region
      %688 = dma.done [#allocation4], 32
    $region25: #{tpu_custom_call.1} parent=1 // pred_fallthru
      _
    %689 = vsyncpa [#allocation4], 1

</llo_original>
